<compile_context>
chip_gen: v5e
topology: v5e:2x2
jax: 0.10.0
libtpu: 0.0.40
codegen_flags: <defaults>
</compile_context>

<pallas_src>
import jax
import jax.numpy as jnp
import numpy as np
from jax import lax
from jax.experimental import pallas as pl
from jax.experimental.pallas import tpu as pltpu

# ----------------------------- model configuration -----------------------------
B = 2                         # batch
H = W = 16                    # input spectrogram height / width
KH = KW = 4                   # conv1_size
COUT = 8                      # n_feature_maps1 (Cin = 1)
OH = H - KH + 1               # 13  conv output rows (stride 1, VALID)
OW = W - KW + 1               # 13  conv output cols
PH = OH // 2                  # 6   pooled rows (MaxPool2d(2,2), floor mode)
PW = OW // 2                  # 6   pooled cols
CONV_LANES = OW * COUT        # 104 conv GEMM output lanes, lane = s*COUT + c
MW = CONV_LANES - COUT        # 96  lanes surviving the column-pool shift
CONV_NET_SIZE = COUT * PH * PW  # 288
LIN = 32                      # nn.Linear(conv_net_size, 32)
DNN1 = 64                     # dnn1_size
N_LABELS = 10
LHS_ROWS = B * H - KH + 1     # 29  rows of the batch-fused conv LHS (covers all valid rows)

# packed parameter slab layout (one DMA)
SLAB_W = PH * DNN1            # 384 lanes
R_TCONV = 0                   # rows 0..63   : fused-tap banded conv weight (64, 104)
R_WLD = R_TCONV + KH * W      # rows 64..159 : expanded lin@dnn1 weight (96, 384)
R_WO = R_WLD + MW             # rows 160..223: output weight (64, 10)
R_BCONV = R_WO + DNN1         # row 224      : conv bias tiled over cols (104,)
R_BLD = R_BCONV + 1           # row 225      : folded lin/dnn1 bias (64,)
R_BO = R_BLD + 1              # row 226      : output bias (10,)
R_TOTAL = 232                 # padded to a multiple of 8 sublanes


# ------------------------------- fused Pallas kernel ---------------------------
def speech_fused_kernel(x_ref, p_ref, o_ref):
    """Whole SpeechModel forward; 3 MXU dots total, everything VMEM/vreg resident.

    x_ref : (B*H, W)        input, batch folded into rows
    p_ref : (R_TOTAL, 384)  packed parameters (see layout constants above)
    o_ref : (B, N_LABELS)
    """
    xf = x_ref[...]                                                   # (32, 16)

    # ---- conv1 (+bias, ReLU) as ONE K=64 GEMM over all batches & output rows ----
    # LHS row m = [x[m,:], x[m+1,:], x[m+2,:], x[m+3,:]]; valid conv rows are m = b*H + r
    # (r < OH); cross-batch seam rows are garbage but never consumed downstream.
    lhs = jnp.concatenate(
        [xf[0:LHS_ROWS, :], xf[1:LHS_ROWS + 1, :],
         xf[2:LHS_ROWS + 2, :], xf[3:LHS_ROWS + 3, :]], axis=-1)      # (29, 64)
    tconv = p_ref[R_TCONV:R_TCONV + KH * W, 0:CONV_LANES]             # (64, 104)
    bconv = p_ref[R_BCONV:R_BCONV + 1, 0:CONV_LANES]                  # (1, 104)
    conv = jnp.maximum(
        jnp.dot(lhs, tconv, preferred_element_type=jnp.float32) + bconv, 0.0)   # (29, 104)
    # dropout: identity at inference.

    # ---- 2x2 max-pool (floor mode), staying in the lane-interleaved layout ----
    rmax = jnp.maximum(conv[0:LHS_ROWS - 1, :], conv[1:LHS_ROWS, :])  # (28, 104)
    cmax = jnp.maximum(rmax[:, 0:MW], rmax[:, COUT:COUT + MW])        # (28, 96)
    # pooled value (b, c, p, q) lives at cmax[b*H + 2p, 2q*COUT + c]; every other entry is an
    # overlapping-window max annihilated by zero rows of the expanded weight below.

    # ---- flatten + lin + dnn1 (folded: no nonlinearity between them) as ONE GEMM ----
    wld = p_ref[R_WLD:R_WLD + MW, :]                                  # (96, 384)
    z = jnp.dot(cmax, wld, preferred_element_type=jnp.float32)        # (28, 384)
    bld = p_ref[R_BLD:R_BLD + 1, 0:DNN1]                              # (1, 64)
    rows = []
    for b in range(B):                                                # B*PH cheap slice-adds
        acc = bld
        for p in range(PH):
            m = b * H + 2 * p
            acc = acc + z[m:m + 1, p * DNN1:(p + 1) * DNN1]
        rows.append(acc)
    h = jnp.maximum(jnp.concatenate(rows, axis=0), 0.0)               # (B, 64)

    # ---- output layer, single (B, N_LABELS) store ----
    wo = p_ref[R_WO:R_WO + DNN1, 0:N_LABELS]                          # (64, 10)
    bo = p_ref[R_BO:R_BO + 1, 0:N_LABELS]                             # (1, 10)
    o_ref[...] = (jnp.dot(h, wo, preferred_element_type=jnp.float32) + bo).astype(o_ref.dtype)


@jax.jit
def speech_model_forward(x, pslab):
    """x: (B, H, W) float32 -> logits (B, N_LABELS). Single fused pallas_call, 2 input DMAs."""
    xf = x.reshape(B * H, W)    # contiguous (free) reshape: batch folded into rows
    return pl.pallas_call(
        speech_fused_kernel,
        out_shape=jax.ShapeDtypeStruct((B, N_LABELS), jnp.float32),
        in_specs=[pl.BlockSpec(memory_space=pltpu.VMEM)] * 2,
        out_specs=pl.BlockSpec(memory_space=pltpu.VMEM),
    )(xf, pslab)


# --------------------- one-time host-side parameter re-layout -------------------
def prepare_kernel_params(params):
    """Re-layout & fold the canonical (PyTorch-convention) parameters for the fused kernel.

    Done ONCE at init on the host; the per-call jitted forward contains only the kernel.
    """
    wconv = np.asarray(params["conv1_w"])       # (COUT, 1, KH, KW)
    bconv = np.asarray(params["conv1_b"])       # (COUT,)
    lin_wT = np.asarray(params["lin_wT"])       # (288, 32), rows in torch NCHW-flatten order
    lin_b = np.asarray(params["lin_b"])         # (1, 32)
    dnn1_wT = np.asarray(params["dnn1_wT"])     # (32, 64)
    dnn1_b = np.asarray(params["dnn1_b"])       # (1, 64)
    out_wT = np.asarray(params["out_wT"])       # (64, 10)
    out_b = np.asarray(params["out_b"])         # (1, 10)

    # Fused-tap banded conv weight: conv[m, s*8+c] = sum_{i,w} LHS[m, i*16+w] * tconv[i*16+w, s*8+c]
    tconv = np.zeros((KH * W, CONV_LANES), np.float32)
    for c in range(COUT):
        for i in range(KH):
            for j in range(KW):
                for s in range(OW):
                    tconv[i * W + s + j, s * COUT + c] = wconv[c, 0, i, j]

    bconv_t = np.tile(bconv.astype(np.float32), OW)                   # (104,), lane s*8+c -> b[c]

    # Fold lin + dnn1 (no nonlinearity between them in the torch forward).
    w_ld = (lin_wT @ dnn1_wT).astype(np.float32)                      # (288, 64)
    b_ld = (lin_b @ dnn1_wT + dnn1_b).astype(np.float32)              # (1, 64)

    # Expand to pooled-lane layout: row 2q*8+c of block p carries torch-flatten row c*36+p*6+q;
    # all other (odd-column / overlap) rows stay zero to annihilate the junk pool lanes.
    wld = np.zeros((MW, PH * DNN1), np.float32)
    for c in range(COUT):
        for p in range(PH):
            for q in range(PW):
                wld[2 * q * COUT + c, p * DNN1:(p + 1) * DNN1] = w_ld[c * PH * PW + p * PW + q, :]
    keep = np.zeros(MW, bool)
    for c in range(COUT):
        for q in range(PW):
            keep[2 * q * COUT + c] = True
    assert np.all(wld[~keep] == 0.0), "zero-padding invariant of the expanded lin weight violated"

    # Pack everything into one (R_TOTAL, 384) f32 slab -> a single parameter DMA.
    slab = np.zeros((R_TOTAL, SLAB_W), np.float32)
    slab[R_TCONV:R_TCONV + KH * W, :CONV_LANES] = tconv
    slab[R_WLD:R_WLD + MW, :] = wld
    slab[R_WO:R_WO + DNN1, :N_LABELS] = out_wT
    slab[R_BCONV, :CONV_LANES] = bconv_t
    slab[R_BLD, :DNN1] = b_ld[0]
    slab[R_BO, :N_LABELS] = out_b[0]
    return jnp.asarray(slab)


# ------------------------- deterministic canonical params ----------------------
def init_params(key):
    ks = jax.random.split(key, 8)
    s = 0.05
    return {
        "conv1_w": jax.random.normal(ks[0], (COUT, 1, KH, KW), jnp.float32) * s,
        "conv1_b": jax.random.normal(ks[1], (COUT,), jnp.float32) * s,
        # linear weights stored pre-transposed (in_features, out_features)
        "lin_wT":  jax.random.normal(ks[2], (CONV_NET_SIZE, LIN), jnp.float32) * s,
        "lin_b":   jax.random.normal(ks[3], (1, LIN), jnp.float32) * s,
        "dnn1_wT": jax.random.normal(ks[4], (LIN, DNN1), jnp.float32) * s,
        "dnn1_b":  jax.random.normal(ks[5], (1, DNN1), jnp.float32) * s,
        "out_wT":  jax.random.normal(ks[6], (DNN1, N_LABELS), jnp.float32) * s,
        "out_b":   jax.random.normal(ks[7], (1, N_LABELS), jnp.float32) * s,
    }


# ------------------------------ reference (pure JAX) ----------------------------
def reference_forward(x, params):
    xi = x[:, None, :, :]
    conv = lax.conv_general_dilated(
        xi, params["conv1_w"], window_strides=(1, 1), padding="VALID",
        dimension_numbers=("NCHW", "OIHW", "NCHW"))
    conv = jnp.maximum(conv + params["conv1_b"][None, :, None, None], 0.0)
    n, c, h, w = conv.shape
    pooled = conv[:, :, :2 * (h // 2), :2 * (w // 2)]
    pooled = pooled.reshape(n, c, h // 2, 2, w // 2, 2).max(axis=(3, 5))
    flat = pooled.reshape(n, -1)
    h1 = flat @ params["lin_wT"] + params["lin_b"]
    h2 = jnp.maximum(h1 @ params["dnn1_wT"] + params["dnn1_b"], 0.0)
    return h2 @ params["out_wT"] + params["out_b"]


# ----------------------------------- main ---------------------------------------
if __name__ == "__main__":
    key = jax.random.PRNGKey(0)
    kx, kp = jax.random.split(key)
    x = jax.random.normal(kx, (B, H, W), jnp.float32)

    params = init_params(kp)
    pslab = prepare_kernel_params(params)       # one-time host re-layout / folding

    out = speech_model_forward(x, pslab)
    out = jax.block_until_ready(out)

    ref = reference_forward(x, params)
    np.testing.assert_allclose(np.asarray(out), np.asarray(ref), rtol=1e-4, atol=1e-4)
    assert out.shape == (B, N_LABELS)

    print("KERNEL_OK")
</pallas_src>

<mosaic_0001>
module attributes {stable_mosaic.version = 11 : i64} {
  func.func @speech_fused_kernel(%arg0: memref<32x16xf32, #tpu.memory_space<vmem>>, %arg1: memref<232x384xf32, #tpu.memory_space<vmem>>, %arg2: memref<2x10xf32, #tpu.memory_space<vmem>>) attributes {dimension_semantics = [], scalar_prefetch = 0 : i64, scratch_operands = 0 : i64, tpu.core_type = #tpu.core_type<tc>} {
    %c0 = arith.constant 0 : index
    %c0_0 = arith.constant 0 : index
    %0 = vector.load %arg0[%c0, %c0_0] : memref<32x16xf32, #tpu.memory_space<vmem>>, vector<32x16xf32>
    %1 = vector.extract_strided_slice %0 {offsets = [0, 0], sizes = [29, 16], strides = [1, 1]} : vector<32x16xf32> to vector<29x16xf32>
    %2 = vector.extract_strided_slice %0 {offsets = [1, 0], sizes = [29, 16], strides = [1, 1]} : vector<32x16xf32> to vector<29x16xf32>
    %3 = vector.extract_strided_slice %0 {offsets = [2, 0], sizes = [29, 16], strides = [1, 1]} : vector<32x16xf32> to vector<29x16xf32>
    %4 = vector.extract_strided_slice %0 {offsets = [3, 0], sizes = [29, 16], strides = [1, 1]} : vector<32x16xf32> to vector<29x16xf32>
    %5 = tpu.concatenate %1, %2, %3, %4 in 1 : vector<29x16xf32>, vector<29x16xf32>, vector<29x16xf32>, vector<29x16xf32> -> vector<29x64xf32>
    %c0_1 = arith.constant 0 : index
    %c0_2 = arith.constant 0 : index
    %6 = vector.load %arg1[%c0_1, %c0_2] : memref<232x384xf32, #tpu.memory_space<vmem>>, vector<64x104xf32>
    %c224 = arith.constant 224 : index
    %c0_3 = arith.constant 0 : index
    %7 = vector.load %arg1[%c224, %c0_3] : memref<232x384xf32, #tpu.memory_space<vmem>>, vector<1x104xf32>
    %cst = arith.constant dense<0.000000e+00> : vector<29x104xf32>
    %8 = tpu.matmul %5, %6, %cst {dimension_numbers = #tpu.dot_dimension_numbers<[1], [0], [0], [1], [0, 0, 1, 1], [], []>} : vector<29x64xf32>, vector<64x104xf32>, vector<29x104xf32> -> vector<29x104xf32>
    %9 = vector.broadcast %7 : vector<1x104xf32> to vector<29x104xf32>
    %10 = arith.addf %8, %9 : vector<29x104xf32>
    %cst_4 = arith.constant 0.000000e+00 : f32
    %11 = vector.broadcast %cst_4 : f32 to vector<29x104xf32>
    %12 = arith.maximumf %10, %11 : vector<29x104xf32>
    %13 = vector.extract_strided_slice %12 {offsets = [0, 0], sizes = [28, 104], strides = [1, 1]} : vector<29x104xf32> to vector<28x104xf32>
    %14 = vector.extract_strided_slice %12 {offsets = [1, 0], sizes = [28, 104], strides = [1, 1]} : vector<29x104xf32> to vector<28x104xf32>
    %15 = arith.maximumf %13, %14 : vector<28x104xf32>
    %16 = vector.extract_strided_slice %15 {offsets = [0, 0], sizes = [28, 96], strides = [1, 1]} : vector<28x104xf32> to vector<28x96xf32>
    %17 = vector.extract_strided_slice %15 {offsets = [0, 8], sizes = [28, 96], strides = [1, 1]} : vector<28x104xf32> to vector<28x96xf32>
    %18 = arith.maximumf %16, %17 : vector<28x96xf32>
    %c64 = arith.constant 64 : index
    %c0_5 = arith.constant 0 : index
    %19 = vector.load %arg1[%c64, %c0_5] : memref<232x384xf32, #tpu.memory_space<vmem>>, vector<96x384xf32>
    %cst_6 = arith.constant dense<0.000000e+00> : vector<28x384xf32>
    %20 = tpu.matmul %18, %19, %cst_6 {dimension_numbers = #tpu.dot_dimension_numbers<[1], [0], [0], [1], [0, 0, 1, 1], [], []>} : vector<28x96xf32>, vector<96x384xf32>, vector<28x384xf32> -> vector<28x384xf32>
    %c225 = arith.constant 225 : index
    %c0_7 = arith.constant 0 : index
    %21 = vector.load %arg1[%c225, %c0_7] : memref<232x384xf32, #tpu.memory_space<vmem>>, vector<1x64xf32>
    %22 = vector.extract_strided_slice %20 {offsets = [0, 0], sizes = [1, 64], strides = [1, 1]} : vector<28x384xf32> to vector<1x64xf32>
    %23 = arith.addf %21, %22 : vector<1x64xf32>
    %24 = vector.extract_strided_slice %20 {offsets = [2, 64], sizes = [1, 64], strides = [1, 1]} : vector<28x384xf32> to vector<1x64xf32>
    %25 = arith.addf %23, %24 : vector<1x64xf32>
    %26 = vector.extract_strided_slice %20 {offsets = [4, 128], sizes = [1, 64], strides = [1, 1]} : vector<28x384xf32> to vector<1x64xf32>
    %27 = arith.addf %25, %26 : vector<1x64xf32>
    %28 = vector.extract_strided_slice %20 {offsets = [6, 192], sizes = [1, 64], strides = [1, 1]} : vector<28x384xf32> to vector<1x64xf32>
    %29 = arith.addf %27, %28 : vector<1x64xf32>
    %30 = vector.extract_strided_slice %20 {offsets = [8, 256], sizes = [1, 64], strides = [1, 1]} : vector<28x384xf32> to vector<1x64xf32>
    %31 = arith.addf %29, %30 : vector<1x64xf32>
    %32 = vector.extract_strided_slice %20 {offsets = [10, 320], sizes = [1, 64], strides = [1, 1]} : vector<28x384xf32> to vector<1x64xf32>
    %33 = arith.addf %31, %32 : vector<1x64xf32>
    %34 = vector.extract_strided_slice %20 {offsets = [16, 0], sizes = [1, 64], strides = [1, 1]} : vector<28x384xf32> to vector<1x64xf32>
    %35 = arith.addf %21, %34 : vector<1x64xf32>
    %36 = vector.extract_strided_slice %20 {offsets = [18, 64], sizes = [1, 64], strides = [1, 1]} : vector<28x384xf32> to vector<1x64xf32>
    %37 = arith.addf %35, %36 : vector<1x64xf32>
    %38 = vector.extract_strided_slice %20 {offsets = [20, 128], sizes = [1, 64], strides = [1, 1]} : vector<28x384xf32> to vector<1x64xf32>
    %39 = arith.addf %37, %38 : vector<1x64xf32>
    %40 = vector.extract_strided_slice %20 {offsets = [22, 192], sizes = [1, 64], strides = [1, 1]} : vector<28x384xf32> to vector<1x64xf32>
    %41 = arith.addf %39, %40 : vector<1x64xf32>
    %42 = vector.extract_strided_slice %20 {offsets = [24, 256], sizes = [1, 64], strides = [1, 1]} : vector<28x384xf32> to vector<1x64xf32>
    %43 = arith.addf %41, %42 : vector<1x64xf32>
    %44 = vector.extract_strided_slice %20 {offsets = [26, 320], sizes = [1, 64], strides = [1, 1]} : vector<28x384xf32> to vector<1x64xf32>
    %45 = arith.addf %43, %44 : vector<1x64xf32>
    %46 = tpu.concatenate %33, %45 in 0 : vector<1x64xf32>, vector<1x64xf32> -> vector<2x64xf32>
    %cst_8 = arith.constant 0.000000e+00 : f32
    %47 = vector.broadcast %cst_8 : f32 to vector<2x64xf32>
    %48 = arith.maximumf %46, %47 : vector<2x64xf32>
    %c160 = arith.constant 160 : index
    %c0_9 = arith.constant 0 : index
    %49 = vector.load %arg1[%c160, %c0_9] : memref<232x384xf32, #tpu.memory_space<vmem>>, vector<64x10xf32>
    %c226 = arith.constant 226 : index
    %c0_10 = arith.constant 0 : index
    %50 = vector.load %arg1[%c226, %c0_10] : memref<232x384xf32, #tpu.memory_space<vmem>>, vector<1x10xf32>
    %cst_11 = arith.constant dense<0.000000e+00> : vector<2x10xf32>
    %51 = tpu.matmul %48, %49, %cst_11 {dimension_numbers = #tpu.dot_dimension_numbers<[1], [0], [0], [1], [0, 0, 1, 1], [], []>} : vector<2x64xf32>, vector<64x10xf32>, vector<2x10xf32> -> vector<2x10xf32>
    %52 = vector.broadcast %50 : vector<1x10xf32> to vector<2x10xf32>
    %53 = arith.addf %51, %52 : vector<2x10xf32>
    %c0_12 = arith.constant 0 : index
    %c0_13 = arith.constant 0 : index
    %54 = vector.load %arg2[%c0_12, %c0_13] : memref<2x10xf32, #tpu.memory_space<vmem>>, vector<2x10xf32>
    tpu.vector_store %arg2[%c0_12, %c0_13], %53 {strides = array<i32>} : memref<2x10xf32, #tpu.memory_space<vmem>>, vector<2x10xf32>,
    return
  }
}

</mosaic_0001>

<llo_original>
// kernel: speech_model_forward.1
$region0: #{speech_model_forward.1}
  #allocation0 [shape = 'u32[]', space=smem, size = 0x4, offset = 0x4, fixed_abs, tag = 'smem constant byte address 0x4 - core index']
  #allocation1 [shape = 'u32[72,128]{1,0:T(1,128)}', space=vmem, size = 0x9000, scoped, tag = 'internal scratch']
  %s0 = inlined_call_operand.hbm [shape: f32[32,16], index: 0, kind: input, shape index: {}]
  %s1 = inlined_call_operand.hbm [shape: f32[232,384], index: 1, kind: input, shape index: {}]
  %s2 = inlined_call_operand.hbm [shape: f32[2,10], index: 2, kind: output, shape index: {}]
  %s3 = sld [smem:[#allocation0]]
  $region26: #{speech_model_forward.1} parent=0
    _
  %s5 = ssub.s32 1, %s3
  %s6 = scalar_select 0, %s5, %s3
  $region1: #{speech_model_forward.1} parent=0
    #allocation2 [shape = 'u8[16384]{0}', space=vmem, size = 0x4000, scoped, tag = 'input window, operand 0, single buffered']
    #allocation3 [shape = 's32[1]{0}', space=sflag, size = 0x4, scoped, tag = 'scoped memory for speech_model_forward.1']
    #allocation4 [shape = 's32[1]{0}', space=sflag, size = 0x4, scoped, tag = 'scoped memory for speech_model_forward.1']
    #allocation5 [shape = 'u8[356352]{0}', space=vmem, size = 0x57000, scoped, tag = 'input window, operand 1, single buffered']
    #allocation6 [shape = 's32[1]{0}', space=sflag, size = 0x4, scoped, tag = 'scoped memory for speech_model_forward.1']
    #allocation7 [shape = 'u8[1024]{0}', space=vmem, size = 0x400, scoped, tag = 'output window, operand 0, single buffered']
    %7 = vsyncpa [#allocation3], 0
    %8 = vsyncpa [#allocation6], 0
    %9 = vsyncpa [#allocation4], 0
    // Predicated region
    $region2: #{speech_model_forward.1} parent=1 // pred_check
      _
    $region3: #{speech_model_forward.1} parent=1 // pred_check_branch
      %11 = sbr.rel (0) target = $region5
    $region4: #{speech_model_forward.1} parent=1 // pred_region
      %13 = vsyncadd [#allocation3], 0
      %s14 = sshll.u32 %s0, 4
      %s15 = int_to_ptr.hbm [resolvable:$true] %s14
      %s16 = sshll.u32 [#allocation2], 4
      %s17 = int_to_ptr.vmem [resolvable:$true] %s16
      %22 = dma.hbm_to_vmem [thread:$0]  %s15, 512, %s17, [#allocation3], 128, 128, 8
    $region5: #{speech_model_forward.1} parent=1 // pred_fallthru
      _
    // Predicated region
    $region6: #{speech_model_forward.1} parent=1 // pred_check
      _
    $region7: #{speech_model_forward.1} parent=1 // pred_check_branch
      %24 = sbr.rel (0) target = $region9
    $region8: #{speech_model_forward.1} parent=1 // pred_region
      %26 = vsyncadd [#allocation6], 0
      %s27 = sshll.u32 %s1, 4
      %s28 = int_to_ptr.hbm [resolvable:$true] %s27
      %s29 = sshll.u32 [#allocation5], 4
      %s30 = int_to_ptr.vmem [resolvable:$true] %s29
      %35 = dma.hbm_to_vmem [thread:$0]  %s28, 11136, %s30, [#allocation6], 384, 384, 24
    $region9: #{speech_model_forward.1} parent=1 // pred_fallthru
      _
    // Predicated region
    $region10: #{speech_model_forward.1} parent=1 // pred_check
      _
    $region11: #{speech_model_forward.1} parent=1 // pred_check_branch
      %37 = sbr.rel (0) target = $region13
    $region12: #{speech_model_forward.1} parent=1 // pred_region
      %39 = dma.done [#allocation3], 512
    $region13: #{speech_model_forward.1} parent=1 // pred_fallthru
      _
    // Predicated region
    $region14: #{speech_model_forward.1} parent=1 // pred_check
      _
    $region15: #{speech_model_forward.1} parent=1 // pred_check_branch
      %41 = sbr.rel (0) target = $region17
    $region16: #{speech_model_forward.1} parent=1 // pred_region
      %43 = dma.done [#allocation6], 11136
    $region17: #{speech_model_forward.1} parent=1 // pred_fallthru
      _
    %v44 = vld [vmem:[#allocation2] sm:$0xff]
    %v45 = vld [vmem:[#allocation2 + $0x8] sm:$0xff]
    %v46 = vld [vmem:[#allocation2 + $0x10] sm:$0xff]
    %v47 = vld [vmem:[#allocation2 + $0x18] sm:$0xff]
    %vm52 = vcmask 1046528
    %v53 = vrot.slane %v44, 1
    %v54 = vrot.slane %v45, 1
    %v55 = vsel %vm52, %v53, %v54
    %v56 = vrot.slane %v46, 1
    %v57 = vsel %vm52, %v54, %v56
    %v58 = vrot.slane %v47, 1
    %v59 = vsel %vm52, %v56, %v58
    %60 = vrot.lane.b32.xlu0 %v55, 16
    %v61 = vpop.permute.xlu0 %60
    %62 = vrot.lane.b32.xlu0 %v57, 16
    %v63 = vpop.permute.xlu0 %62
    %64 = vrot.lane.b32.xlu0 %v59, 16
    %v65 = vpop.permute.xlu0 %64
    %66 = vrot.lane.b32.xlu0 %v58, 16
    %v67 = vpop.permute.xlu0 %66
    %vm72 = vcmask 1045504
    %v73 = vrot.slane %v44, 2
    %v74 = vrot.slane %v45, 2
    %v75 = vsel %vm72, %v73, %v74
    %v76 = vrot.slane %v46, 2
    %v77 = vsel %vm72, %v74, %v76
    %v78 = vrot.slane %v47, 2
    %v79 = vsel %vm72, %v76, %v78
    %80 = vrot.lane.b32.xlu0 %v75, 32
    %v81 = vpop.permute.xlu0 %80
    %82 = vrot.lane.b32.xlu0 %v77, 32
    %v83 = vpop.permute.xlu0 %82
    %84 = vrot.lane.b32.xlu0 %v79, 32
    %v85 = vpop.permute.xlu0 %84
    %86 = vrot.lane.b32.xlu0 %v78, 32
    %v87 = vpop.permute.xlu0 %86
    %vm92 = vcmask 1044480
    %v93 = vrot.slane %v44, 3
    %v94 = vrot.slane %v45, 3
    %v95 = vsel %vm92, %v93, %v94
    %v96 = vrot.slane %v46, 3
    %v97 = vsel %vm92, %v94, %v96
    %v98 = vrot.slane %v47, 3
    %v99 = vsel %vm92, %v96, %v98
    %100 = vrot.lane.b32.xlu0 %v95, 48
    %v101 = vpop.permute.xlu0 %100
    %102 = vrot.lane.b32.xlu0 %v97, 48
    %v103 = vpop.permute.xlu0 %102
    %104 = vrot.lane.b32.xlu0 %v99, 48
    %v105 = vpop.permute.xlu0 %104
    %106 = vrot.lane.b32.xlu0 %v98, 48
    %v107 = vpop.permute.xlu0 %106
    %vm112 = vcmask 130048
    %v113 = vsel %vm112, %v44, %v61
    %v114 = vsel %vm112, %v45, %v63
    %v115 = vsel %vm112, %v46, %v65
    %v116 = vsel %vm112, %v47, %v67
    %vm117 = vcmask 261120
    %v118 = vsel %vm117, %v113, %v81
    %v119 = vsel %vm117, %v114, %v83
    %v120 = vsel %vm117, %v115, %v85
    %v121 = vsel %vm117, %v116, %v87
    %vm122 = vcmask 392192
    %v123 = vsel %vm122, %v118, %v101
    %v124 = vsel %vm122, %v119, %v103
    %v125 = vsel %vm122, %v120, %v105
    %v126 = vsel %vm122, %v121, %v107
    %v127 = vld [vmem:[#allocation5] sm:$0xff]
    %v128 = vld [vmem:[#allocation5 + $0x18] sm:$0xff]
    %v129 = vld [vmem:[#allocation5 + $0x30] sm:$0xff]
    %v130 = vld [vmem:[#allocation5 + $0x48] sm:$0xff]
    %v131 = vld [vmem:[#allocation5 + $0x60] sm:$0xff]
    %v132 = vld [vmem:[#allocation5 + $0x78] sm:$0xff]
    %v133 = vld [vmem:[#allocation5 + $0x90] sm:$0xff]
    %v134 = vld [vmem:[#allocation5 + $0xa8] sm:$0xff]
    %v135 = vld [vmem:[#allocation5 + $0x2a0] ss:$0 sm:$0xff]
    %vm136 = vcmask 523264
    %v138 = vsel %vm136, %v123, 0
    %v141 = vsel %vm136, %v124, 0
    %v144 = vsel %vm136, %v125, 0
    %v147 = vsel %vm136, %v126, 0
    %149 = vmatpush.msra.mxu0 0.0
    %150 = vmatpush.msra.mxu0 0.0
    %151 = vmatpush.msra.mxu0 0.0
    %152 = vmatpush.msra.mxu0 0.0
    %153 = vmatpush.msra.mxu0 0.0
    %154 = vmatpush.msra.mxu0 0.0
    %155 = vmatpush.msra.mxu0 0.0
    %156 = vmatpush.msra.mxu0 0.0
    %157 = vmatpush.msra.mxu0 %v134
    %158 = vmatpush.msra.mxu0 %v133
    %159 = vmatpush.msra.mxu0 %v132
    %160 = vmatpush.msra.mxu0 %v131
    %161 = vmatpush.msra.mxu0 %v130
    %162 = vmatpush.msra.mxu0 %v129
    %163 = vmatpush.msra.mxu0 %v128
    %164 = vmatpush.msra.mxu0 %v127
    %165 = vmatmul.f32.gmra.mxu0 %v138
    %v166 = vpop.f32.mrf.mxu0
    %v167 = vadd.f32 %v135, %v166
    %168 = vmatmul.f32.gmra.mxu0 %v141
    %v169 = vpop.f32.mrf.mxu0
    %v170 = vadd.f32 %v135, %v169
    %171 = vmatmul.f32.gmra.mxu0 %v144
    %v172 = vpop.f32.mrf.mxu0
    %v173 = vadd.f32 %v135, %v172
    %174 = vmatmul.f32.gmra.mxu0 %v147
    %v175 = vpop.f32.mrf.mxu0
    %v176 = vadd.f32 %v135, %v175
    %177 = vdwg.mxu0
    %v178 = vmax.f32 %v167, 0.0
    %v179 = vmax.f32 %v170, 0.0
    %v180 = vmax.f32 %v173, 0.0
    %v181 = vmax.f32 %v176, 0.0
    %v186 = vrot.slane %v178, 1
    %v187 = vrot.slane %v179, 1
    %v188 = vsel %vm52, %v186, %v187
    %v189 = vrot.slane %v180, 1
    %v190 = vsel %vm52, %v187, %v189
    %v191 = vrot.slane %v181, 1
    %v192 = vsel %vm52, %v189, %v191
    %v197 = vmax.f32 %v178, %v188
    %v198 = vmax.f32 %v179, %v190
    %v199 = vmax.f32 %v180, %v192
    %v200 = vmax.f32 %v181, %v191
    %205 = vrot.lane.b32.xlu0 %v197, 120
    %v206 = vpop.permute.xlu0 %205
    %207 = vrot.lane.b32.xlu0 %v198, 120
    %v208 = vpop.permute.xlu0 %207
    %209 = vrot.lane.b32.xlu0 %v199, 120
    %v210 = vpop.permute.xlu0 %209
    %211 = vrot.lane.b32.xlu0 %v200, 120
    %v212 = vpop.permute.xlu0 %211
    %v217 = vmax.f32 %v197, %v206
    %v218 = vmax.f32 %v198, %v208
    %v219 = vmax.f32 %v199, %v210
    %v220 = vmax.f32 %v200, %v212
    %v221 = vld [vmem:[#allocation5 + $0xc0] sm:$0xff]
    %v222 = vld [vmem:[#allocation5 + $0xc8] sm:$0xff]
    %v223 = vld [vmem:[#allocation5 + $0xd0] sm:$0xff]
    %v224 = vld [vmem:[#allocation5 + $0xd8] sm:$0xff]
    %v225 = vld [vmem:[#allocation5 + $0xe0] sm:$0xff]
    %v226 = vld [vmem:[#allocation5 + $0xe8] sm:$0xff]
    %v227 = vld [vmem:[#allocation5 + $0xf0] sm:$0xff]
    %v228 = vld [vmem:[#allocation5 + $0xf8] sm:$0xff]
    %v229 = vld [vmem:[#allocation5 + $0x100] sm:$0xff]
    %v230 = vld [vmem:[#allocation5 + $0x108] sm:$0xff]
    %v231 = vld [vmem:[#allocation5 + $0x110] sm:$0xff]
    %v232 = vld [vmem:[#allocation5 + $0x118] sm:$0xff]
    %v233 = vld [vmem:[#allocation5 + $0x120] sm:$0xff]
    %v234 = vld [vmem:[#allocation5 + $0x128] sm:$0xff]
    %v235 = vld [vmem:[#allocation5 + $0x130] sm:$0xff]
    %v236 = vld [vmem:[#allocation5 + $0x138] sm:$0xff]
    %v237 = vld [vmem:[#allocation5 + $0x140] sm:$0xff]
    %v238 = vld [vmem:[#allocation5 + $0x148] sm:$0xff]
    %v239 = vld [vmem:[#allocation5 + $0x150] sm:$0xff]
    %v240 = vld [vmem:[#allocation5 + $0x158] sm:$0xff]
    %v241 = vld [vmem:[#allocation5 + $0x160] sm:$0xff]
    %v242 = vld [vmem:[#allocation5 + $0x168] sm:$0xff]
    %v243 = vld [vmem:[#allocation5 + $0x170] sm:$0xff]
    %v244 = vld [vmem:[#allocation5 + $0x178] sm:$0xff]
    %v245 = vld [vmem:[#allocation5 + $0x180] sm:$0xff]
    %v246 = vld [vmem:[#allocation5 + $0x188] sm:$0xff]
    %v247 = vld [vmem:[#allocation5 + $0x190] sm:$0xff]
    %v248 = vld [vmem:[#allocation5 + $0x198] sm:$0xff]
    %v249 = vld [vmem:[#allocation5 + $0x1a0] sm:$0xff]
    %v250 = vld [vmem:[#allocation5 + $0x1a8] sm:$0xff]
    %v251 = vld [vmem:[#allocation5 + $0x1b0] sm:$0xff]
    %v252 = vld [vmem:[#allocation5 + $0x1b8] sm:$0xff]
    %v253 = vld [vmem:[#allocation5 + $0x1c0] sm:$0xff]
    %v254 = vld [vmem:[#allocation5 + $0x1c8] sm:$0xff]
    %v255 = vld [vmem:[#allocation5 + $0x1d0] sm:$0xff]
    %v256 = vld [vmem:[#allocation5 + $0x1d8] sm:$0xff]
    %vm257 = vcmask 785408
    %v259 = vsel %vm257, %v217, 0
    %v262 = vsel %vm257, %v218, 0
    %v265 = vsel %vm257, %v219, 0
    %v268 = vsel %vm257, %v220, 0
    %270 = vmatpush.msra.mxu0 0.0
    %271 = vmatpush.msra.mxu0 0.0
    %272 = vmatpush.msra.mxu0 0.0
    %273 = vmatpush.msra.mxu0 0.0
    %274 = vmatpush.msra.mxu0 %v254
    %275 = vmatpush.msra.mxu0 %v251
    %276 = vmatpush.msra.mxu0 %v248
    %277 = vmatpush.msra.mxu0 %v245
    %278 = vmatpush.msra.mxu0 %v242
    %279 = vmatpush.msra.mxu0 %v239
    %280 = vmatpush.msra.mxu0 %v236
    %281 = vmatpush.msra.mxu0 %v233
    %282 = vmatpush.msra.mxu0 %v230
    %283 = vmatpush.msra.mxu0 %v227
    %284 = vmatpush.msra.mxu0 %v224
    %285 = vmatpush.msra.mxu0 %v221
    %286 = vmatmul.f32.gmra.mxu0 %v259
    %v287 = vpop.f32.mrf.mxu0
    %v288 = vadd.f32 0.0, %v287
    %289 = vmatmul.f32.gmra.mxu0 %v262
    %v290 = vpop.f32.mrf.mxu0
    %291 = vmatmul.f32.gmra.mxu0 %v265
    %v292 = vpop.f32.mrf.mxu0
    %v293 = vadd.f32 0.0, %v292
    %294 = vmatmul.f32.gmra.mxu0 %v268
    %v295 = vpop.f32.mrf.mxu0
    %296 = vdwg.mxu0
    %297 = vmatpush.msra.mxu0 0.0
    %298 = vmatpush.msra.mxu0 0.0
    %299 = vmatpush.msra.mxu0 0.0
    %300 = vmatpush.msra.mxu0 0.0
    %301 = vmatpush.msra.mxu0 %v255
    %302 = vmatpush.msra.mxu0 %v252
    %303 = vmatpush.msra.mxu0 %v249
    %304 = vmatpush.msra.mxu0 %v246
    %305 = vmatpush.msra.mxu0 %v243
    %306 = vmatpush.msra.mxu0 %v240
    %307 = vmatpush.msra.mxu0 %v237
    %308 = vmatpush.msra.mxu0 %v234
    %309 = vmatpush.msra.mxu0 %v231
    %310 = vmatpush.msra.mxu0 %v228
    %311 = vmatpush.msra.mxu0 %v225
    %312 = vmatpush.msra.mxu0 %v222
    %313 = vmatmul.f32.gmra.mxu0 %v259
    %v314 = vpop.f32.mrf.mxu0
    %v315 = vadd.f32 0.0, %v314
    %316 = vmatmul.f32.gmra.mxu0 %v262
    %v317 = vpop.f32.mrf.mxu0
    %318 = vmatmul.f32.gmra.mxu0 %v265
    %v319 = vpop.f32.mrf.mxu0
    %v320 = vadd.f32 0.0, %v319
    %321 = vmatmul.f32.gmra.mxu0 %v268
    %v322 = vpop.f32.mrf.mxu0
    %323 = vdwg.mxu0
    %324 = vmatpush.msra.mxu0 0.0
    %325 = vmatpush.msra.mxu0 0.0
    %326 = vmatpush.msra.mxu0 0.0
    %327 = vmatpush.msra.mxu0 0.0
    %328 = vmatpush.msra.mxu0 %v256
    %329 = vmatpush.msra.mxu0 %v253
    %330 = vmatpush.msra.mxu0 %v250
    %331 = vmatpush.msra.mxu0 %v247
    %332 = vmatpush.msra.mxu0 %v244
    %333 = vmatpush.msra.mxu0 %v241
    %334 = vmatpush.msra.mxu0 %v238
    %335 = vmatpush.msra.mxu0 %v235
    %336 = vmatpush.msra.mxu0 %v232
    %337 = vmatpush.msra.mxu0 %v229
    %338 = vmatpush.msra.mxu0 %v226
    %339 = vmatpush.msra.mxu0 %v223
    %340 = vmatmul.f32.gmra.mxu0 %v259
    %v341 = vpop.f32.mrf.mxu0
    %342 = vmatmul.f32.gmra.mxu0 %v262
    %v343 = vpop.f32.mrf.mxu0
    %v344 = vadd.f32 0.0, %v343
    %345 = vmatmul.f32.gmra.mxu0 %v265
    %v346 = vpop.f32.mrf.mxu0
    %347 = vmatmul.f32.gmra.mxu0 %v268
    %v348 = vpop.f32.mrf.mxu0
    %v349 = vadd.f32 0.0, %v348
    %350 = vdwg.mxu0
    %v351 = vld [vmem:[#allocation5 + $0x2a1] ss:$0 sm:$0xff]
    %v352 = vadd.f32 %v351, %v288
    %v354 = vrot.slane %v288, 2
    %355 = vrot.lane.b32.xlu0 %v354, 64
    %v356 = vpop.permute.xlu0 %355
    %v358 = vadd.f32 %v352, %v356
    %v360 = vrot.slane %v315, 4
    %v362 = vadd.f32 %v358, %v360
    %v363 = vrot.slane %v315, 6
    %364 = vrot.lane.b32.xlu0 %v363, 64
    %v365 = vpop.permute.xlu0 %364
    %v367 = vadd.f32 %v362, %v365
    %v368 = vadd.f32 %v367, %v344
    %v370 = vrot.slane %v344, 2
    %371 = vrot.lane.b32.xlu0 %v370, 64
    %v372 = vpop.permute.xlu0 %371
    %v374 = vadd.f32 %v368, %v372
    %v375 = vadd.f32 %v351, %v293
    %v377 = vrot.slane %v293, 2
    %378 = vrot.lane.b32.xlu0 %v377, 64
    %v379 = vpop.permute.xlu0 %378
    %v381 = vadd.f32 %v375, %v379
    %v383 = vrot.slane %v320, 4
    %v385 = vadd.f32 %v381, %v383
    %v386 = vrot.slane %v320, 6
    %387 = vrot.lane.b32.xlu0 %v386, 64
    %v388 = vpop.permute.xlu0 %387
    %v390 = vadd.f32 %v385, %v388
    %v391 = vadd.f32 %v390, %v349
    %v393 = vrot.slane %v349, 2
    %394 = vrot.lane.b32.xlu0 %v393, 64
    %v395 = vpop.permute.xlu0 %394
    %v397 = vadd.f32 %v391, %v395
    %v399 = vrot.slane %v397, 7
    %vm401 = vcmask 1040384
    %v402 = vsel %vm401, %v374, %v399
    %v403 = vmax.f32 %v402, 0.0
    %v404 = vld [vmem:[#allocation5 + $0x1e0] sm:$0xff]
    %v405 = vld [vmem:[#allocation5 + $0x1f8] sm:$0xff]
    %v406 = vld [vmem:[#allocation5 + $0x210] sm:$0xff]
    %v407 = vld [vmem:[#allocation5 + $0x228] sm:$0xff]
    %v408 = vld [vmem:[#allocation5 + $0x240] sm:$0xff]
    %v409 = vld [vmem:[#allocation5 + $0x258] sm:$0xff]
    %v410 = vld [vmem:[#allocation5 + $0x270] sm:$0xff]
    %v411 = vld [vmem:[#allocation5 + $0x288] sm:$0xff]
    %v412 = vld [vmem:[#allocation5 + $0x2a2] ss:$0 sm:$0xff]
    %v414 = vsel %vm136, %v403, 0
    %416 = vmatpush.msra.mxu0 0.0
    %417 = vmatpush.msra.mxu0 0.0
    %418 = vmatpush.msra.mxu0 0.0
    %419 = vmatpush.msra.mxu0 0.0
    %420 = vmatpush.msra.mxu0 0.0
    %421 = vmatpush.msra.mxu0 0.0
    %422 = vmatpush.msra.mxu0 0.0
    %423 = vmatpush.msra.mxu0 0.0
    %424 = vmatpush.msra.mxu0 %v411
    %425 = vmatpush.msra.mxu0 %v410
    %426 = vmatpush.msra.mxu0 %v409
    %427 = vmatpush.msra.mxu0 %v408
    %428 = vmatpush.msra.mxu0 %v407
    %429 = vmatpush.msra.mxu0 %v406
    %430 = vmatpush.msra.mxu0 %v405
    %431 = vmatpush.msra.mxu0 %v404
    %432 = vmatmul.f32.gmra.mxu0 %v414
    %v433 = vpop.f32.mrf.mxu0
    %v434 = vadd.f32 %v412, %v433
    %435 = vdwg.mxu0
    %vm436 = vcmask 74752
    %437 = vst.msk [vmem:[#allocation7] sm:$0x3] %vm436, %v434
    // Predicated region
    $region18: #{speech_model_forward.1} parent=1 // pred_check
      _
    $region19: #{speech_model_forward.1} parent=1 // pred_check_branch
      %439 = sbr.rel (0) target = $region21
    $region20: #{speech_model_forward.1} parent=1 // pred_region
      %441 = vsyncadd [#allocation4], 0
      %s443 = sshll.u32 [#allocation7], 4
      %s444 = int_to_ptr.vmem [resolvable:$true] %s443
      %s445 = sshll.u32 %s2, 4
      %s446 = int_to_ptr.hbm [resolvable:$true] %s445
      %448 = dma.vmem_to_hbm [thread:$0]  %s444, 32, %s446, [#allocation4]
    $region21: #{speech_model_forward.1} parent=1 // pred_fallthru
      _
    // Predicated region
    $region22: #{speech_model_forward.1} parent=1 // pred_check
      _
    $region23: #{speech_model_forward.1} parent=1 // pred_check_branch
      %450 = sbr.rel (0) target = $region25
    $region24: #{speech_model_forward.1} parent=1 // pred_region
      %452 = dma.done [#allocation4], 32
    $region25: #{speech_model_forward.1} parent=1 // pred_fallthru
      _
    %453 = vsyncpa [#allocation3], 1
    %454 = vsyncpa [#allocation6], 1
    %455 = vsyncpa [#allocation4], 1

</llo_original>
